<compile_context>
chip_gen: v5e
topology: v5e:2x2
jax: 0.10.0
libtpu: 0.0.40
codegen_flags: <defaults>
</compile_context>

<pallas_src>
import jax
import jax.numpy as jnp
from jax.experimental import pallas as pl
from jax.experimental.pallas import tpu as pltpu

S_EMB = 64           # 'wrn' student embedding dim
S_PAD = 128          # K zero-padded to a full lane width for the MXU
T_EMB = 128          # 'wrn' teacher embedding dim
NUM_CLASSES = 10
BN_EPS = 1e-5
DROPOUT_P = 0.5
MAX_TB = 256         # max batch-tile rows (multiple of 8)


# ---------------------------------------------------------------------------
# Pallas kernel: (x * scale + shift) -> * dropout mask -> @ W + b, per tile.
# ---------------------------------------------------------------------------
def _fc1_kernel(emb_ref, mask_ref, scale_ref, shift_ref, w_ref, b_ref, out_ref):
    x = emb_ref[...]                                       # (TB, 128) f32
    xn = x * scale_ref[...] + shift_ref[...]               # folded BN affine (VPU)
    xd = xn.astype(jnp.bfloat16) * mask_ref[...]           # dropout, mask in {0, 2}
    y = jnp.dot(xd, w_ref[...],
                preferred_element_type=jnp.float32) + b_ref[...]  # MXU, f32 acc
    out_ref[...] = y.astype(out_ref.dtype)


def _choose_tile(batch):
    tb = min(MAX_TB, max(8, ((batch + 7) // 8) * 8))
    b_pad = ((batch + tb - 1) // tb) * tb
    return tb, b_pad


def _prep_fc1_operands(emb, gamma, beta, w, b, dropout_key):
    """Host-side (XLA) prep shared by kernel wrapper and reference:
    fold BN batch stats into scale/shift, zero-pad K 64->128 and the batch to
    a tile multiple, draw the pre-scaled dropout mask.  Padded feature columns
    get scale = shift = 0 and zero weight rows, so they contribute nothing."""
    batch = emb.shape[0]
    tb, b_pad = _choose_tile(batch)

    emb32 = emb.astype(jnp.float32)
    # BatchNorm1d training mode: biased batch statistics over the real batch.
    mean = jnp.mean(emb32, axis=0)
    var = jnp.mean((emb32 - mean) ** 2, axis=0)
    inv_std = jax.lax.rsqrt(var + BN_EPS)
    scale = gamma.astype(jnp.float32) * inv_std
    shift = beta.astype(jnp.float32) - mean * scale

    scale_p = jnp.pad(scale, (0, S_PAD - S_EMB)).reshape(1, S_PAD)
    shift_p = jnp.pad(shift, (0, S_PAD - S_EMB)).reshape(1, S_PAD)
    emb_p = jnp.pad(emb32, ((0, b_pad - batch), (0, S_PAD - S_EMB)))

    # Dropout(0.5), training mode.  Pre-scaled by 1/(1-p) so the kernel does a
    # single multiply per element.
    # TODO(synk): mask is deterministic given dropout_key but cannot bit-match
    #             torch's RNG stream.
    keep = jax.random.bernoulli(dropout_key, 1.0 - DROPOUT_P, (b_pad, S_PAD))
    mask = jnp.where(keep, 1.0 / (1.0 - DROPOUT_P), 0.0).astype(jnp.bfloat16)

    w_p = jnp.pad(w.astype(jnp.float32),
                  ((0, S_PAD - S_EMB), (0, 0))).astype(jnp.bfloat16)
    b_p = b.reshape(1, T_EMB).astype(jnp.float32)
    return tb, b_pad, emb_p, mask, scale_p, shift_p, w_p, b_p


def fc1_pallas(emb, gamma, beta, w, b, dropout_key):
    """EmbTrans.fc1 applied to emb_fea [B, S_EMB] -> [B, T_EMB] (training mode)."""
    batch = emb.shape[0]
    tb, b_pad, emb_p, mask, scale_p, shift_p, w_p, b_p = _prep_fc1_operands(
        emb, gamma, beta, w, b, dropout_key)

    out = pl.pallas_call(
        _fc1_kernel,
        out_shape=jax.ShapeDtypeStruct((b_pad, T_EMB), jnp.float32),
        grid=(b_pad // tb,),
        in_specs=[
            pl.BlockSpec((tb, S_PAD), lambda i: (i, 0)),      # emb batch tile
            pl.BlockSpec((tb, S_PAD), lambda i: (i, 0)),      # dropout mask tile
            pl.BlockSpec((1, S_PAD), lambda i: (0, 0)),       # BN scale (resident)
            pl.BlockSpec((1, S_PAD), lambda i: (0, 0)),       # BN shift (resident)
            pl.BlockSpec((S_PAD, T_EMB), lambda i: (0, 0)),   # weight  (resident)
            pl.BlockSpec((1, T_EMB), lambda i: (0, 0)),       # bias    (resident)
        ],
        out_specs=pl.BlockSpec((tb, T_EMB), lambda i: (i, 0)),
        compiler_params=pltpu.CompilerParams(
            dimension_semantics=("parallel",)),  # v7x: shard tiles over 2 TCs
    )(emb_p, mask, scale_p, shift_p, w_p, b_p)
    return out[:batch]


def fc1_reference(emb, gamma, beta, w, b, dropout_key):
    """Pure-JAX mirror of the kernel math (same mask, same bf16 casts)."""
    batch = emb.shape[0]
    _, _, emb_p, mask, scale_p, shift_p, w_p, b_p = _prep_fc1_operands(
        emb, gamma, beta, w, b, dropout_key)
    xn = emb_p * scale_p + shift_p
    xd = xn.astype(jnp.bfloat16) * mask
    y = jnp.dot(xd, w_p, preferred_element_type=jnp.float32) + b_p
    return y[:batch]


# ---------------------------------------------------------------------------
# Stub student (external to EmbTrans, plain-JAX glue): GAP + two linear heads.
# Returns (emb_fea [B, S_EMB], logits [B, NUM_CLASSES]) like
# `student(x, embed=True)` in the PyTorch code.
# ---------------------------------------------------------------------------
def student_forward(x, params):
    feat = jnp.mean(x, axis=(2, 3))                               # [B, C]
    emb = feat @ params["w_emb"] + params["b_emb"]                # [B, S_EMB]
    logits = emb @ params["w_cls"] + params["b_cls"]              # [B, NUM_CLASSES]
    return emb, logits


def emb_trans_forward(x, params, dropout_key, embed=True):
    """Pallas-backed equivalent of EmbTrans.forward ('wrn' branch, training mode).
    Note: at tiny batch the pallas_call is launch-overhead bound; a plain XLA
    path would be faster below a few hundred rows.
    TODO(synk): BatchNorm running_mean/running_var are not updated (forward-only).
    """
    emb_fea, logits = student_forward(x, params)
    if embed:
        emb_fea = fc1_pallas(emb_fea, params["bn_gamma"], params["bn_beta"],
                             params["fc_w"], params["fc_b"], dropout_key)
        return emb_fea, logits
    return logits


def make_params():
    key = jax.random.PRNGKey(0)
    k1, k2, k3 = jax.random.split(key, 3)
    C = 4
    return {
        # stub student params
        "w_emb": jax.random.normal(k1, (C, S_EMB), jnp.float32) * 0.1,
        "b_emb": jnp.zeros((S_EMB,), jnp.float32),
        "w_cls": jax.random.normal(k2, (S_EMB, NUM_CLASSES), jnp.float32) * 0.1,
        "b_cls": jnp.zeros((NUM_CLASSES,), jnp.float32),
        # EmbTrans.fc1 params (init per __init__: gamma=1, beta=0, linear bias=0)
        "bn_gamma": jnp.ones((S_EMB,), jnp.float32),
        "bn_beta": jnp.zeros((S_EMB,), jnp.float32),
        "fc_w": jax.random.normal(k3, (S_EMB, T_EMB), jnp.float32) * 0.05,
        "fc_b": jnp.zeros((T_EMB,), jnp.float32),
    }


if __name__ == "__main__":
    params = make_params()
    root = jax.random.PRNGKey(0)
    kx, kdrop, kbig = jax.random.split(root, 3)

    # Small end-to-end run (B=2), matching the module's usage.
    x = jax.random.normal(kx, (2, 4, 16, 16), jnp.float32)       # NCHW
    emb_fea, logits = emb_trans_forward(x, params, kdrop, embed=True)
    emb_fea = jax.block_until_ready(emb_fea)
    logits = jax.block_until_ready(logits)
    assert emb_fea.shape == (2, T_EMB)
    assert logits.shape == (2, NUM_CLASSES)
    assert bool(jnp.all(jnp.isfinite(emb_fea)))
    assert bool(jnp.all(jnp.isfinite(logits)))

    # embed=False path returns logits only.
    logits_only = jax.block_until_ready(
        emb_trans_forward(x, params, kdrop, embed=False))
    assert logits_only.shape == (2, NUM_CLASSES)

    # Multi-tile / padded-batch correctness check: B=300 -> TB=256, grid=(2,).
    emb_big = jax.random.normal(kbig, (300, S_EMB), jnp.float32)
    out_pallas = jax.block_until_ready(
        fc1_pallas(emb_big, params["bn_gamma"], params["bn_beta"],
                   params["fc_w"], params["fc_b"], kdrop))
    out_ref = jax.block_until_ready(
        fc1_reference(emb_big, params["bn_gamma"], params["bn_beta"],
                      params["fc_w"], params["fc_b"], kdrop))
    assert out_pallas.shape == (300, T_EMB)
    assert bool(jnp.allclose(out_pallas, out_ref, atol=5e-3, rtol=5e-3)), (
        float(jnp.max(jnp.abs(out_pallas - out_ref))))

    print("KERNEL_OK")
</pallas_src>

<mosaic_0001>
module attributes {stable_mosaic.version = 11 : i64} {
  func.func @_fc1_kernel(%arg0: i32, %arg1: memref<8x128xf32, #tpu.memory_space<vmem>>, %arg2: memref<8x128xbf16, #tpu.memory_space<vmem>>, %arg3: memref<1x128xf32, #tpu.memory_space<vmem>>, %arg4: memref<1x128xf32, #tpu.memory_space<vmem>>, %arg5: memref<128x128xbf16, #tpu.memory_space<vmem>>, %arg6: memref<1x128xf32, #tpu.memory_space<vmem>>, %arg7: memref<8x128xf32, #tpu.memory_space<vmem>>) attributes {dimension_semantics = [#tpu.dimension_semantics<parallel>], iteration_bounds = array<i64: 1>, scalar_prefetch = 0 : i64, scratch_operands = 0 : i64, tpu.core_type = #tpu.core_type<tc>, window_params = [{transform_indices = @transform_0, window_bounds = array<i64: 8, 128>}, {transform_indices = @transform_1, window_bounds = array<i64: 8, 128>}, {pipeline_mode = #tpu.pipeline_mode<synchronous>, transform_indices = @transform_2, window_bounds = array<i64: 1, 128>}, {pipeline_mode = #tpu.pipeline_mode<synchronous>, transform_indices = @transform_3, window_bounds = array<i64: 1, 128>}, {pipeline_mode = #tpu.pipeline_mode<synchronous>, transform_indices = @transform_4, window_bounds = array<i64: 128, 128>}, {pipeline_mode = #tpu.pipeline_mode<synchronous>, transform_indices = @transform_5, window_bounds = array<i64: 1, 128>}, {transform_indices = @transform_6, window_bounds = array<i64: 8, 128>}]} {
    %c0 = arith.constant 0 : index
    %c0_0 = arith.constant 0 : index
    %0 = vector.load %arg1[%c0, %c0_0] : memref<8x128xf32, #tpu.memory_space<vmem>>, vector<8x128xf32>
    %c0_1 = arith.constant 0 : index
    %c0_2 = arith.constant 0 : index
    %1 = vector.load %arg3[%c0_1, %c0_2] : memref<1x128xf32, #tpu.memory_space<vmem>>, vector<1x128xf32>
    %2 = vector.broadcast %1 : vector<1x128xf32> to vector<8x128xf32>
    %3 = arith.mulf %0, %2 : vector<8x128xf32>
    %c0_3 = arith.constant 0 : index
    %c0_4 = arith.constant 0 : index
    %4 = vector.load %arg4[%c0_3, %c0_4] : memref<1x128xf32, #tpu.memory_space<vmem>>, vector<1x128xf32>
    %5 = vector.broadcast %4 : vector<1x128xf32> to vector<8x128xf32>
    %6 = arith.addf %3, %5 : vector<8x128xf32>
    %7 = arith.truncf %6 : vector<8x128xf32> to vector<8x128xbf16>
    %c0_5 = arith.constant 0 : index
    %c0_6 = arith.constant 0 : index
    %8 = vector.load %arg2[%c0_5, %c0_6] : memref<8x128xbf16, #tpu.memory_space<vmem>>, vector<8x128xbf16>
    %9 = arith.mulf %7, %8 : vector<8x128xbf16>
    %c0_7 = arith.constant 0 : index
    %c0_8 = arith.constant 0 : index
    %10 = vector.load %arg5[%c0_7, %c0_8] : memref<128x128xbf16, #tpu.memory_space<vmem>>, vector<128x128xbf16>
    %cst = arith.constant dense<0.000000e+00> : vector<8x128xf32>
    %11 = tpu.matmul %9, %10, %cst {dimension_numbers = #tpu.dot_dimension_numbers<[1], [0], [0], [1], [0, 0, 1, 1], [], []>} : vector<8x128xbf16>, vector<128x128xbf16>, vector<8x128xf32> -> vector<8x128xf32>
    %c0_9 = arith.constant 0 : index
    %c0_10 = arith.constant 0 : index
    %12 = vector.load %arg6[%c0_9, %c0_10] : memref<1x128xf32, #tpu.memory_space<vmem>>, vector<1x128xf32>
    %13 = vector.broadcast %12 : vector<1x128xf32> to vector<8x128xf32>
    %14 = arith.addf %11, %13 : vector<8x128xf32>
    %c0_11 = arith.constant 0 : index
    %c0_12 = arith.constant 0 : index
    %15 = vector.load %arg7[%c0_11, %c0_12] : memref<8x128xf32, #tpu.memory_space<vmem>>, vector<8x128xf32>
    tpu.vector_store %arg7[%c0_11, %c0_12], %14 {strides = array<i32>} : memref<8x128xf32, #tpu.memory_space<vmem>>, vector<8x128xf32>,
    return
  }
  func.func @transform_0(%arg0: i32) -> (i32, i32) {
    %c0_i32 = arith.constant 0 : i32
    %c0_i32_0 = arith.constant 0 : i32
    return %arg0, %c0_i32 : i32, i32
  }
  func.func @transform_1(%arg0: i32) -> (i32, i32) {
    %c0_i32 = arith.constant 0 : i32
    %c0_i32_0 = arith.constant 0 : i32
    return %arg0, %c0_i32 : i32, i32
  }
  func.func @transform_2(%arg0: i32) -> (i32, i32) {
    %c0_i32 = arith.constant 0 : i32
    %c0_i32_0 = arith.constant 0 : i32
    %c0_i32_1 = arith.constant 0 : i32
    return %c0_i32, %c0_i32_0 : i32, i32
  }
  func.func @transform_3(%arg0: i32) -> (i32, i32) {
    %c0_i32 = arith.constant 0 : i32
    %c0_i32_0 = arith.constant 0 : i32
    %c0_i32_1 = arith.constant 0 : i32
    return %c0_i32, %c0_i32_0 : i32, i32
  }
  func.func @transform_4(%arg0: i32) -> (i32, i32) {
    %c0_i32 = arith.constant 0 : i32
    %c0_i32_0 = arith.constant 0 : i32
    %c0_i32_1 = arith.constant 0 : i32
    return %c0_i32, %c0_i32_0 : i32, i32
  }
  func.func @transform_5(%arg0: i32) -> (i32, i32) {
    %c0_i32 = arith.constant 0 : i32
    %c0_i32_0 = arith.constant 0 : i32
    %c0_i32_1 = arith.constant 0 : i32
    return %c0_i32, %c0_i32_0 : i32, i32
  }
  func.func @transform_6(%arg0: i32) -> (i32, i32) {
    %c0_i32 = arith.constant 0 : i32
    %c0_i32_0 = arith.constant 0 : i32
    return %arg0, %c0_i32 : i32, i32
  }
}

</mosaic_0001>

<llo_original>
// kernel: tpu_custom_call.1
$region0: #{tpu_custom_call.1}
  #allocation0 [shape = 'u32[]', space=smem, size = 0x4, offset = 0x4, fixed_abs, tag = 'smem constant byte address 0x4 - core index']
  #allocation1 [shape = 'u32[72,128]{1,0:T(1,128)}', space=vmem, size = 0x9000, scoped, tag = 'internal scratch']
  %s0 = inlined_call_operand.hbm [shape: f32[8,128], index: 0, kind: input, shape index: {}]
  %s1 = inlined_call_operand.hbm [shape: bf16[8,128], index: 1, kind: input, shape index: {}]
  %s2 = inlined_call_operand.vmem [shape: f32[1,128], index: 2, kind: input, shape index: {}]
  %s3 = inlined_call_operand.vmem [shape: f32[1,128], index: 3, kind: input, shape index: {}]
  %s4 = inlined_call_operand.hbm [shape: bf16[128,128], index: 4, kind: input, shape index: {}]
  %s5 = inlined_call_operand.vmem [shape: f32[1,128], index: 5, kind: input, shape index: {}]
  %s6 = inlined_call_operand.hbm [shape: f32[8,128], index: 6, kind: output, shape index: {}]
  %s7 = sld [smem:[#allocation0]]
  $region46: #{tpu_custom_call.1} parent=0
    _
  %s9 = ssub.s32 1, %s7
  %s10 = scalar_select 0, %s9, %s7
  $region1: #{tpu_custom_call.1} parent=0
    #allocation2 [shape = 'u8[4096]{0}', space=vmem, size = 0x1000, scoped, tag = 'input window, operand 0, single buffered']
    #allocation3 [shape = 's32[1]{0}', space=sflag, size = 0x4, scoped, tag = 'scoped memory for tpu_custom_call.1']
    #allocation4 [shape = 's32[1]{0}', space=sflag, size = 0x4, scoped, tag = 'scoped memory for tpu_custom_call.1']
    #allocation5 [shape = 'u8[2048]{0}', space=vmem, size = 0x800, scoped, tag = 'input window, operand 1, single buffered']
    #allocation6 [shape = 's32[1]{0}', space=sflag, size = 0x4, scoped, tag = 'scoped memory for tpu_custom_call.1']
    #allocation7 [shape = 'u8[32768]{0}', space=vmem, size = 0x8000, scoped, tag = 'input window, operand 4, single buffered']
    #allocation8 [shape = 'u8[4096]{0}', space=vmem, size = 0x1000, scoped, tag = 'output window, operand 0, single buffered']
    %11 = vsyncpa [#allocation3], 0
    %12 = vsyncpa [#allocation6], 0
    %13 = vsyncpa [#allocation4], 0
    // Predicated region
    $region2: #{tpu_custom_call.1} parent=1 // pred_check
      _
    $region3: #{tpu_custom_call.1} parent=1 // pred_check_branch
      %15 = sbr.rel (0) target = $region5
    $region4: #{tpu_custom_call.1} parent=1 // pred_region
      %17 = vsyncadd [#allocation3], 0
      %s19 = sshll.u32 %s0, 4
      %s20 = int_to_ptr.hbm [resolvable:$true] %s19
      %s21 = sshll.u32 [#allocation2], 4
      %s22 = int_to_ptr.vmem [resolvable:$true] %s21
      %24 = dma.hbm_to_vmem [thread:$0]  %s20, 128, %s22, [#allocation3]
    $region5: #{tpu_custom_call.1} parent=1 // pred_fallthru
      _
    // Predicated region
    $region6: #{tpu_custom_call.1} parent=1 // pred_check
      _
    $region7: #{tpu_custom_call.1} parent=1 // pred_check_branch
      %26 = sbr.rel (0) target = $region9
    $region8: #{tpu_custom_call.1} parent=1 // pred_region
      %28 = vsyncadd [#allocation6], 0
      %s30 = sshll.u32 %s1, 4
      %s31 = int_to_ptr.hbm [resolvable:$true] %s30
      %s32 = sshll.u32 [#allocation5], 4
      %s33 = int_to_ptr.vmem [resolvable:$true] %s32
      %35 = dma.hbm_to_vmem [thread:$0]  %s31, 64, %s33, [#allocation6]
    $region9: #{tpu_custom_call.1} parent=1 // pred_fallthru
      _
    // Predicated region
    $region10: #{tpu_custom_call.1} parent=1 // pred_check
      _
    $region11: #{tpu_custom_call.1} parent=1 // pred_check_branch
      %37 = sbr.rel (0) target = $region13
    $region12: #{tpu_custom_call.1} parent=1 // pred_region
      _
    $region13: #{tpu_custom_call.1} parent=1 // pred_fallthru
      _
    // Predicated region
    $region14: #{tpu_custom_call.1} parent=1 // pred_check
      _
    $region15: #{tpu_custom_call.1} parent=1 // pred_check_branch
      %39 = sbr.rel (0) target = $region17
    $region16: #{tpu_custom_call.1} parent=1 // pred_region
      _
    $region17: #{tpu_custom_call.1} parent=1 // pred_fallthru
      _
    // Predicated region
    $region18: #{tpu_custom_call.1} parent=1 // pred_check
      _
    $region19: #{tpu_custom_call.1} parent=1 // pred_check_branch
      %41 = sbr.rel (0) target = $region21
    $region20: #{tpu_custom_call.1} parent=1 // pred_region
      %43 = vsyncadd [#allocation6], 0
      %s44 = sshll.u32 %s4, 4
      %s45 = int_to_ptr.hbm [resolvable:$true] %s44
      %s46 = sshll.u32 [#allocation7], 4
      %s47 = int_to_ptr.vmem [resolvable:$true] %s46
      %52 = dma.hbm_to_vmem [thread:$0]  %s45, 1024, %s47, [#allocation6], 64, 64, 4
    $region21: #{tpu_custom_call.1} parent=1 // pred_fallthru
      _
    // Predicated region
    $region22: #{tpu_custom_call.1} parent=1 // pred_check
      _
    $region23: #{tpu_custom_call.1} parent=1 // pred_check_branch
      %54 = sbr.rel (0) target = $region25
    $region24: #{tpu_custom_call.1} parent=1 // pred_region
      _
    $region25: #{tpu_custom_call.1} parent=1 // pred_fallthru
      _
    // Predicated region
    $region26: #{tpu_custom_call.1} parent=1 // pred_check
      _
    $region27: #{tpu_custom_call.1} parent=1 // pred_check_branch
      %56 = sbr.rel (0) target = $region29
    $region28: #{tpu_custom_call.1} parent=1 // pred_region
      %58 = dma.done [#allocation3], 128
    $region29: #{tpu_custom_call.1} parent=1 // pred_fallthru
      _
    // Predicated region
    $region30: #{tpu_custom_call.1} parent=1 // pred_check
      _
    $region31: #{tpu_custom_call.1} parent=1 // pred_check_branch
      %60 = sbr.rel (0) target = $region33
    $region32: #{tpu_custom_call.1} parent=1 // pred_region
      %62 = dma.done [#allocation6], 64
    $region33: #{tpu_custom_call.1} parent=1 // pred_fallthru
      _
    // Predicated region
    $region34: #{tpu_custom_call.1} parent=1 // pred_check
      _
    $region35: #{tpu_custom_call.1} parent=1 // pred_check_branch
      %64 = sbr.rel (0) target = $region37
    $region36: #{tpu_custom_call.1} parent=1 // pred_region
      %66 = dma.done [#allocation6], 1024
    $region37: #{tpu_custom_call.1} parent=1 // pred_fallthru
      _
    %v67 = vld [vmem:[#allocation2] sm:$0xff]
    %v68 = vld [vmem:[%s2] sm:$0x1]
    %v70 = vperm.slane %v68, 0
    %v72 = vmul.f32 %v67, %v70
    %v73 = vld [vmem:[%s3] sm:$0x1]
    %v75 = vperm.slane %v73, 0
    %v77 = vadd.f32 %v72, %v75
    %v78 = vpack.c.bf16 %v77, %v77
    %v79 = vld [vmem:[#allocation5] sm:$0xf]
    %v80 = vunpack.c.l.bf16 %v78
    %v81 = vunpack.c.l.bf16 %v79
    %v82 = vmul.f32 %v80, %v81
    %v83 = vpack.c.bf16 %v82, %v82
    %v84 = vld [vmem:[#allocation7] sm:$0xf]
    %v85 = vld [vmem:[#allocation7 + $0x4] sm:$0xf]
    %v86 = vld [vmem:[#allocation7 + $0x8] sm:$0xf]
    %v87 = vld [vmem:[#allocation7 + $0xc] sm:$0xf]
    %v88 = vld [vmem:[#allocation7 + $0x10] sm:$0xf]
    %v89 = vld [vmem:[#allocation7 + $0x14] sm:$0xf]
    %v90 = vld [vmem:[#allocation7 + $0x18] sm:$0xf]
    %v91 = vld [vmem:[#allocation7 + $0x1c] sm:$0xf]
    %v92 = vld [vmem:[#allocation7 + $0x20] sm:$0xf]
    %v93 = vld [vmem:[#allocation7 + $0x24] sm:$0xf]
    %v94 = vld [vmem:[#allocation7 + $0x28] sm:$0xf]
    %v95 = vld [vmem:[#allocation7 + $0x2c] sm:$0xf]
    %v96 = vld [vmem:[#allocation7 + $0x30] sm:$0xf]
    %v97 = vld [vmem:[#allocation7 + $0x34] sm:$0xf]
    %v98 = vld [vmem:[#allocation7 + $0x38] sm:$0xf]
    %v99 = vld [vmem:[#allocation7 + $0x3c] sm:$0xf]
    %v100 = vld [vmem:[%s5] sm:$0x1]
    %v102 = vperm.slane %v100, 0
    %v120 = vunpack.c.l.b16 %v84
    %v121 = vunpack.c.l.b16 %v85
    %v122 = vunpack.c.l.b16 %v86
    %v123 = vunpack.c.l.b16 %v87
    %v124 = vunpack.c.l.b16 %v88
    %v125 = vunpack.c.l.b16 %v89
    %v126 = vunpack.c.l.b16 %v90
    %v127 = vunpack.c.l.b16 %v91
    %v128 = vunpack.c.l.b16 %v92
    %v129 = vunpack.c.l.b16 %v93
    %v130 = vunpack.c.l.b16 %v94
    %v131 = vunpack.c.l.b16 %v95
    %v132 = vunpack.c.l.b16 %v96
    %v133 = vunpack.c.l.b16 %v97
    %v134 = vunpack.c.l.b16 %v98
    %v135 = vunpack.c.l.b16 %v99
    %v136 = vpack.c.b16 %v121, %v120
    %v137 = vpack.c.b16 %v123, %v122
    %v138 = vpack.c.b16 %v125, %v124
    %v139 = vpack.c.b16 %v127, %v126
    %v140 = vpack.c.b16 %v129, %v128
    %v141 = vpack.c.b16 %v131, %v130
    %v142 = vpack.c.b16 %v133, %v132
    %v143 = vpack.c.b16 %v135, %v134
    %152 = vmatpush.bf16.msra.mxu0 %v143
    %153 = vmatpush.bf16.msra.mxu0 %v142
    %154 = vmatpush.bf16.msra.mxu0 %v141
    %155 = vmatpush.bf16.msra.mxu0 %v140
    %156 = vmatpush.bf16.msra.mxu0 %v139
    %157 = vmatpush.bf16.msra.mxu0 %v138
    %158 = vmatpush.bf16.msra.mxu0 %v137
    %159 = vmatpush.bf16.msra.mxu0 %v136
    %160 = vmatmul.bf16.gmra.mxu0 %v83
    %v161 = vpop.f32.mrf.mxu0
    %v162 = vadd.f32 %v102, %v161
    %v163 = vpop.f32.mrf.mxu0
    %164 = vdwg.mxu0
    %165 = vst [vmem:[#allocation8] sm:$0xff] %v162
    // Predicated region
    $region38: #{tpu_custom_call.1} parent=1 // pred_check
      _
    $region39: #{tpu_custom_call.1} parent=1 // pred_check_branch
      %167 = sbr.rel (0) target = $region41
    $region40: #{tpu_custom_call.1} parent=1 // pred_region
      %169 = vsyncadd [#allocation4], 0
      %s171 = sshll.u32 [#allocation8], 4
      %s172 = int_to_ptr.vmem [resolvable:$true] %s171
      %s173 = sshll.u32 %s6, 4
      %s174 = int_to_ptr.hbm [resolvable:$true] %s173
      %176 = dma.vmem_to_hbm [thread:$0]  %s172, 128, %s174, [#allocation4]
    $region41: #{tpu_custom_call.1} parent=1 // pred_fallthru
      _
    // Predicated region
    $region42: #{tpu_custom_call.1} parent=1 // pred_check
      _
    $region43: #{tpu_custom_call.1} parent=1 // pred_check_branch
      %178 = sbr.rel (0) target = $region45
    $region44: #{tpu_custom_call.1} parent=1 // pred_region
      %180 = dma.done [#allocation4], 128
    $region45: #{tpu_custom_call.1} parent=1 // pred_fallthru
      _
    %181 = vsyncpa [#allocation3], 1
    %182 = vsyncpa [#allocation6], 1
    %183 = vsyncpa [#allocation4], 1

</llo_original>
